<compile_context>
chip_gen: v6e
topology: v6e:2x2x1
jax: 0.10.0
libtpu: 0.0.40
codegen_flags: <defaults>
</compile_context>

<pallas_src>
import numpy as np
import jax
import jax.numpy as jnp
from jax import lax
from jax.experimental import pallas as pl
from jax.experimental.pallas import tpu as pltpu

# ---- small, module-consistent sizes (module defaults scaled down) ----
N_REL = 8          # n_rel
VOCAB = 100        # vocab_size
WORD_DIM = 16      # word_embed_size
POS_DIM = 4        # pos_embed_size
FEAT = WORD_DIM + 2 * POS_DIM   # features_size = 24
MAX_LEN = 16       # max_len (sentences are full length -> F.pad is a no-op)
OUT_C = 32         # out_c
T_OUT = MAX_LEN - 2

BATCH = 4          # number of bags
N_ITEMS = 4        # sentences per bag


def _pcnn_kernel(feat_ref, wc_ref, bc_ref, r_ref, out_ref):
    """Processes ALL bags in a single grid step.

    feat_ref: (B, n_items, max_len, feat)  raw embedded sentence features
    wc_ref  : (feat, 3*out_c)              conv weight, kh-major column groups
    bc_ref  : (1, out_c)                   conv bias
    r_ref   : (n_rel, out_c)               relation embedding matrix
    out_ref : (B, n_rel)                   log-softmax scores
    """
    B, n_items, max_len, fdim = feat_ref.shape
    n_rel, out_c = r_ref.shape
    t_out = max_len - 2

    bc = bc_ref[...]                                   # (1, out_c)
    r = r_ref[...]                                     # (n_rel, out_c)

    # --- encoder: (3, feat) conv as ONE fused MXU matmul + shift-add ---
    # M = B*items*max_len = 256 rows, K = feat = 24, N = 3*out_c = 96.
    flat = feat_ref[...].reshape(B * n_items * max_len, fdim)
    y = jnp.dot(flat, wc_ref[...], preferred_element_type=jnp.float32)
    y = y.reshape(B * n_items, max_len, 3 * out_c)

    # Column group kh of y, shifted by kh time steps, sums to the valid conv.
    conv = (y[:, 0:t_out, 0:out_c]
            + y[:, 1:t_out + 1, out_c:2 * out_c]
            + y[:, 2:t_out + 2, 2 * out_c:3 * out_c])  # (B*items, t_out, out_c)

    # max-pool over time first; bias is time-invariant and tanh is monotone,
    # so tanh(max(conv) + b) == max(tanh(conv + b)) for the pooled values.
    pooled = jnp.tanh(jnp.max(conv, axis=1) + bc)      # (B*items, out_c)

    # --- selective attention over sentences within each bag ---
    # scores[(b,i), r] = sum_c pooled[(b,i), c] * r[r, c]   (MXU, no transpose)
    scores = lax.dot_general(pooled, r, (((1,), (1,)), ((), ())),
                             preferred_element_type=jnp.float32)  # (B*items, n_rel)
    scores = scores.reshape(B, n_items, n_rel)
    scores = scores - jnp.max(scores, axis=1, keepdims=True)      # softmax over items
    e = jnp.exp(scores)
    att_w = e / jnp.sum(e, axis=1, keepdims=True)                 # (B, items, n_rel)

    pooled_b = pooled.reshape(B, n_items, out_c)
    # att[b, r, c] = sum_i att_w[b, i, r] * pooled[b, i, c]  (contraction dim = items = 4)
    att = jnp.sum(att_w[:, :, :, None] * pooled_b[:, :, None, :], axis=1)  # (B, n_rel, out_c)

    # TODO(synk): nn.Dropout(p=0.5, inplace=True) skipped (inference semantics).

    # diag(att @ r.T) == row-wise dot(att, r)
    s = jnp.sum(att * r[None, :, :], axis=-1)          # (B, n_rel)

    # log-softmax over relations
    m = jnp.max(s, axis=-1, keepdims=True)
    lse = m + jnp.log(jnp.sum(jnp.exp(s - m), axis=-1, keepdims=True))
    out_ref[...] = s - lse


def pcnn_attention_forward(feat, conv_w_fused, conv_b_row, r_embed):
    B, n_items, max_len, fdim = feat.shape
    n_rel, out_c = r_embed.shape
    return pl.pallas_call(
        _pcnn_kernel,
        out_shape=jax.ShapeDtypeStruct((B, n_rel), jnp.float32),
        grid_spec=pltpu.PrefetchScalarGridSpec(
            num_scalar_prefetch=0,
            grid=(1,),                                   # single step: all bags at once
            in_specs=[
                pl.BlockSpec((B, n_items, max_len, fdim), lambda g: (0, 0, 0, 0)),
                pl.BlockSpec((fdim, 3 * out_c), lambda g: (0, 0)),
                pl.BlockSpec((1, out_c), lambda g: (0, 0)),
                pl.BlockSpec((n_rel, out_c), lambda g: (0, 0)),
            ],
            out_specs=pl.BlockSpec((B, n_rel), lambda g: (0, 0)),
        ),
        compiler_params=pltpu.CompilerParams(
            dimension_semantics=("arbitrary",)),
    )(feat, conv_w_fused, conv_b_row, r_embed)


# ------------------------- plain-JAX glue -------------------------
def build_features(sent_ids, pos1, pos2, word_embed, pos_embed, max_len):
    """Embedding lookups + position features (pure gather/concat glue).

    Returns the raw feature tensor (B, items, max_len, feat); no im2col.
    """
    wfeat = word_embed[sent_ids]                       # (B, I, L, Wd)
    t = jnp.arange(max_len, dtype=jnp.float32)

    def pos_feat(pos):
        rel = t[None, None, :] - pos[..., None].astype(jnp.float32)
        rel = jnp.clip(rel, -max_len, max_len)         # == clip(x, above, below)
        idx = rel.astype(jnp.int32) + max_len
        return pos_embed[idx]                          # (B, I, L, Pd)

    return jnp.concatenate([wfeat, pos_feat(pos1), pos_feat(pos2)], axis=-1)


def reference_forward(feat, conv_w_flat, conv_b_row, r):
    """Pure-JAX mirror of the forward pass for correctness checking."""
    B, I, L, F = feat.shape
    t_out = L - 2
    # unfold 3-step windows (kh-major, feature-minor) to match conv_w_flat rows
    win = jnp.concatenate([feat[:, :, kh:kh + t_out, :] for kh in range(3)], axis=-1)
    h = jnp.tanh(jnp.einsum('bitk,kc->bitc', win, conv_w_flat) + conv_b_row[None, None])
    pooled = jnp.max(h, axis=2)                        # (B, I, C)
    scores = jnp.einsum('rc,bic->bri', r, pooled)
    att_w = jax.nn.softmax(scores, axis=-1)            # softmax over items
    att = jnp.einsum('bri,bic->brc', att_w, pooled)
    s = jnp.sum(att * r[None], axis=-1)                # diag(att @ r.T)
    return jax.nn.log_softmax(s, axis=-1)


if __name__ == "__main__":
    key = jax.random.PRNGKey(0)
    ks = jax.random.split(key, 8)

    # deterministic "module parameters"
    word_embed = 0.1 * jax.random.normal(ks[0], (VOCAB, WORD_DIM), jnp.float32)
    pos_embed = 0.1 * jax.random.normal(ks[1], (2 * MAX_LEN + 1, POS_DIM), jnp.float32)
    r_embed = 0.1 * jax.random.normal(ks[2], (N_REL, OUT_C), jnp.float32)
    conv_w = 0.1 * jax.random.normal(ks[3], (OUT_C, 1, 3, FEAT), jnp.float32)
    conv_b = 0.1 * jax.random.normal(ks[4], (OUT_C,), jnp.float32)

    # deterministic "bag" inputs: token ids + entity positions per sentence
    sent_ids = jax.random.randint(ks[5], (BATCH, N_ITEMS, MAX_LEN), 0, VOCAB)
    pos1 = jax.random.randint(ks[6], (BATCH, N_ITEMS), 0, MAX_LEN)
    pos2 = jax.random.randint(ks[7], (BATCH, N_ITEMS), 0, MAX_LEN)

    feat = build_features(sent_ids, pos1, pos2, word_embed, pos_embed, MAX_LEN)

    # kernel weight layout: (feat, 3*out_c), kh-major COLUMN groups (fused matmul)
    conv_w_fused = jnp.concatenate([conv_w[:, 0, kh, :].T for kh in range(3)], axis=1)
    # reference weight layout: (3*feat, out_c), kh-major rows
    conv_w_flat = conv_w.reshape(OUT_C, 3 * FEAT).T
    conv_b_row = conv_b.reshape(1, OUT_C)

    pred = pcnn_attention_forward(feat, conv_w_fused, conv_b_row, r_embed)
    pred = jax.block_until_ready(pred)

    ref = reference_forward(feat, conv_w_flat, conv_b_row, r_embed)
    assert pred.shape == (BATCH, N_REL)
    # exact softmax divide restored; tolerance only covers f32 accumulation-order
    # differences between the fused (24x96) matmul and the unfolded reference einsum.
    np.testing.assert_allclose(np.asarray(pred), np.asarray(ref), rtol=1e-4, atol=1e-4)
    print("KERNEL_OK")
</pallas_src>

<mosaic_0001>
module attributes {stable_mosaic.version = 11 : i64} {
  func.func @_pcnn_kernel(%arg0: i32, %arg1: memref<4x4x16x24xf32, #tpu.memory_space<vmem>>, %arg2: memref<24x96xf32, #tpu.memory_space<vmem>>, %arg3: memref<1x32xf32, #tpu.memory_space<vmem>>, %arg4: memref<8x32xf32, #tpu.memory_space<vmem>>, %arg5: memref<4x8xf32, #tpu.memory_space<vmem>>) attributes {dimension_semantics = [#tpu.dimension_semantics<arbitrary>], iteration_bounds = array<i64: 1>, scalar_prefetch = 0 : i64, scratch_operands = 0 : i64, tpu.core_type = #tpu.core_type<tc>, window_params = [{pipeline_mode = #tpu.pipeline_mode<synchronous>, transform_indices = @transform_0, window_bounds = array<i64: 4, 4, 16, 24>}, {pipeline_mode = #tpu.pipeline_mode<synchronous>, transform_indices = @transform_1, window_bounds = array<i64: 24, 96>}, {pipeline_mode = #tpu.pipeline_mode<synchronous>, transform_indices = @transform_2, window_bounds = array<i64: 1, 32>}, {pipeline_mode = #tpu.pipeline_mode<synchronous>, transform_indices = @transform_3, window_bounds = array<i64: 8, 32>}, {pipeline_mode = #tpu.pipeline_mode<synchronous>, transform_indices = @transform_4, window_bounds = array<i64: 4, 8>}]} {
    %c0 = arith.constant 0 : index
    %c0_0 = arith.constant 0 : index
    %0 = vector.load %arg3[%c0, %c0_0] : memref<1x32xf32, #tpu.memory_space<vmem>>, vector<1x32xf32>
    %c0_1 = arith.constant 0 : index
    %c0_2 = arith.constant 0 : index
    %1 = vector.load %arg4[%c0_1, %c0_2] : memref<8x32xf32, #tpu.memory_space<vmem>>, vector<8x32xf32>
    %c0_3 = arith.constant 0 : index
    %c0_4 = arith.constant 0 : index
    %c0_5 = arith.constant 0 : index
    %c0_6 = arith.constant 0 : index
    %2 = vector.load %arg1[%c0_3, %c0_4, %c0_5, %c0_6] : memref<4x4x16x24xf32, #tpu.memory_space<vmem>>, vector<4x4x16x24xf32>
    %3 = vector.shape_cast %2 : vector<4x4x16x24xf32> to vector<256x24xf32>
    %c0_7 = arith.constant 0 : index
    %c0_8 = arith.constant 0 : index
    %4 = vector.load %arg2[%c0_7, %c0_8] : memref<24x96xf32, #tpu.memory_space<vmem>>, vector<24x96xf32>
    %cst = arith.constant dense<0.000000e+00> : vector<256x96xf32>
    %5 = tpu.matmul %3, %4, %cst {dimension_numbers = #tpu.dot_dimension_numbers<[1], [0], [0], [1], [0, 0, 1, 1], [], []>} : vector<256x24xf32>, vector<24x96xf32>, vector<256x96xf32> -> vector<256x96xf32>
    %6 = vector.shape_cast %5 : vector<256x96xf32> to vector<16x16x96xf32>
    %7 = vector.extract_strided_slice %6 {offsets = [0, 0, 0], sizes = [16, 14, 32], strides = [1, 1, 1]} : vector<16x16x96xf32> to vector<16x14x32xf32>
    %8 = vector.extract_strided_slice %6 {offsets = [0, 1, 32], sizes = [16, 14, 32], strides = [1, 1, 1]} : vector<16x16x96xf32> to vector<16x14x32xf32>
    %9 = arith.addf %7, %8 : vector<16x14x32xf32>
    %10 = vector.extract_strided_slice %6 {offsets = [0, 2, 64], sizes = [16, 14, 32], strides = [1, 1, 1]} : vector<16x16x96xf32> to vector<16x14x32xf32>
    %11 = arith.addf %9, %10 : vector<16x14x32xf32>
    %cst_9 = arith.constant dense<0xFF800000> : vector<16x32xf32>
    %12 = vector.multi_reduction <maximumf>, %11, %cst_9 [1] : vector<16x14x32xf32> to vector<16x32xf32>
    %13 = vector.broadcast %0 : vector<1x32xf32> to vector<16x32xf32>
    %14 = arith.addf %12, %13 : vector<16x32xf32>
    %15 = math.tanh %14 : vector<16x32xf32>
    %cst_10 = arith.constant dense<0.000000e+00> : vector<16x8xf32>
    %16 = tpu.matmul %15, %1, %cst_10 {dimension_numbers = #tpu.dot_dimension_numbers<[1], [1], [0], [0], [0, 0, 1, 0], [], []>} : vector<16x32xf32>, vector<8x32xf32>, vector<16x8xf32> -> vector<16x8xf32>
    %17 = vector.shape_cast %16 : vector<16x8xf32> to vector<4x4x8xf32>
    %cst_11 = arith.constant dense<0xFF800000> : vector<4x8xf32>
    %18 = vector.multi_reduction <maximumf>, %17, %cst_11 [1] : vector<4x4x8xf32> to vector<4x8xf32>
    %19 = vector.shape_cast %18 : vector<4x8xf32> to vector<4x1x8xf32>
    %20 = vector.broadcast %19 : vector<4x1x8xf32> to vector<4x4x8xf32>
    %21 = arith.subf %17, %20 : vector<4x4x8xf32>
    %22 = math.exp %21 : vector<4x4x8xf32>
    %cst_12 = arith.constant dense<0.000000e+00> : vector<4x8xf32>
    %23 = vector.multi_reduction <add>, %22, %cst_12 [1] : vector<4x4x8xf32> to vector<4x8xf32>
    %24 = vector.shape_cast %23 : vector<4x8xf32> to vector<4x1x8xf32>
    %25 = vector.broadcast %24 : vector<4x1x8xf32> to vector<4x4x8xf32>
    %26 = arith.divf %22, %25 : vector<4x4x8xf32>
    %27 = vector.shape_cast %15 : vector<16x32xf32> to vector<4x4x32xf32>
    %28 = vector.shape_cast %26 : vector<4x4x8xf32> to vector<4x4x8x1xf32>
    %29 = vector.shape_cast %27 : vector<4x4x32xf32> to vector<4x4x1x32xf32>
    %30 = vector.broadcast %28 : vector<4x4x8x1xf32> to vector<4x4x8x32xf32>
    %31 = vector.broadcast %29 : vector<4x4x1x32xf32> to vector<4x4x8x32xf32>
    %32 = arith.mulf %30, %31 : vector<4x4x8x32xf32>
    %cst_13 = arith.constant dense<0.000000e+00> : vector<4x8x32xf32>
    %33 = vector.multi_reduction <add>, %32, %cst_13 [1] : vector<4x4x8x32xf32> to vector<4x8x32xf32>
    %34 = vector.shape_cast %1 : vector<8x32xf32> to vector<1x8x32xf32>
    %35 = vector.broadcast %34 : vector<1x8x32xf32> to vector<4x8x32xf32>
    %36 = arith.mulf %33, %35 : vector<4x8x32xf32>
    %cst_14 = arith.constant dense<0.000000e+00> : vector<4x8xf32>
    %37 = vector.multi_reduction <add>, %36, %cst_14 [2] : vector<4x8x32xf32> to vector<4x8xf32>
    %cst_15 = arith.constant dense<0xFF800000> : vector<4xf32>
    %38 = vector.multi_reduction <maximumf>, %37, %cst_15 [1] : vector<4x8xf32> to vector<4xf32>
    %39 = vector.shape_cast %38 : vector<4xf32> to vector<4x1xf32>
    %40 = vector.broadcast %39 : vector<4x1xf32> to vector<4x8xf32>
    %41 = arith.subf %37, %40 : vector<4x8xf32>
    %42 = math.exp %41 : vector<4x8xf32>
    %cst_16 = arith.constant dense<0.000000e+00> : vector<4xf32>
    %43 = vector.multi_reduction <add>, %42, %cst_16 [1] : vector<4x8xf32> to vector<4xf32>
    %44 = vector.shape_cast %43 : vector<4xf32> to vector<4x1xf32>
    %45 = math.log %44 : vector<4x1xf32>
    %46 = arith.addf %39, %45 : vector<4x1xf32>
    %47 = vector.broadcast %46 : vector<4x1xf32> to vector<4x8xf32>
    %48 = arith.subf %37, %47 : vector<4x8xf32>
    %c0_17 = arith.constant 0 : index
    %c0_18 = arith.constant 0 : index
    %49 = vector.load %arg5[%c0_17, %c0_18] : memref<4x8xf32, #tpu.memory_space<vmem>>, vector<4x8xf32>
    tpu.vector_store %arg5[%c0_17, %c0_18], %48 {strides = array<i32>} : memref<4x8xf32, #tpu.memory_space<vmem>>, vector<4x8xf32>,
    return
  }
  func.func @transform_0(%arg0: i32) -> (i32, i32, i32, i32) {
    %c0_i32 = arith.constant 0 : i32
    %c0_i32_0 = arith.constant 0 : i32
    %c0_i32_1 = arith.constant 0 : i32
    %c0_i32_2 = arith.constant 0 : i32
    %c0_i32_3 = arith.constant 0 : i32
    return %c0_i32, %c0_i32_0, %c0_i32_1, %c0_i32_2 : i32, i32, i32, i32
  }
  func.func @transform_1(%arg0: i32) -> (i32, i32) {
    %c0_i32 = arith.constant 0 : i32
    %c0_i32_0 = arith.constant 0 : i32
    %c0_i32_1 = arith.constant 0 : i32
    return %c0_i32, %c0_i32_0 : i32, i32
  }
  func.func @transform_2(%arg0: i32) -> (i32, i32) {
    %c0_i32 = arith.constant 0 : i32
    %c0_i32_0 = arith.constant 0 : i32
    %c0_i32_1 = arith.constant 0 : i32
    return %c0_i32, %c0_i32_0 : i32, i32
  }
  func.func @transform_3(%arg0: i32) -> (i32, i32) {
    %c0_i32 = arith.constant 0 : i32
    %c0_i32_0 = arith.constant 0 : i32
    %c0_i32_1 = arith.constant 0 : i32
    return %c0_i32, %c0_i32_0 : i32, i32
  }
  func.func @transform_4(%arg0: i32) -> (i32, i32) {
    %c0_i32 = arith.constant 0 : i32
    %c0_i32_0 = arith.constant 0 : i32
    %c0_i32_1 = arith.constant 0 : i32
    return %c0_i32, %c0_i32_0 : i32, i32
  }
}

</mosaic_0001>

<llo_original>
// kernel: tpu_custom_call.1
$region0: #{tpu_custom_call.1}
  #allocation0 [shape = 'u32[]', space=smem, size = 0x4, offset = 0x4, fixed_abs, tag = 'smem constant byte address 0x4 - core index']
  #allocation1 [shape = 'u32[144,128]{1,0:T(1,128)}', space=vmem, size = 0x12000, scoped, tag = 'internal scratch']
  %s0 = inlined_call_operand.hbm [shape: f32[4,4,16,24], index: 0, kind: input, shape index: {}]
  %s1 = inlined_call_operand.hbm [shape: f32[24,96], index: 1, kind: input, shape index: {}]
  %s2 = inlined_call_operand.vmem [shape: f32[1,32], index: 2, kind: input, shape index: {}]
  %s3 = inlined_call_operand.hbm [shape: f32[8,32], index: 3, kind: input, shape index: {}]
  %s4 = inlined_call_operand.hbm [shape: f32[4,8], index: 4, kind: output, shape index: {}]
  %s5 = sld [smem:[#allocation0]]
  $region38: #{tpu_custom_call.1} parent=0
    _
  %s7 = ssub.s32 1, %s5
  %s8 = scalar_select 0, %s7, %s5
  $region1: #{tpu_custom_call.1} parent=0
    #allocation2 [shape = 'u8[131072]{0}', space=vmem, size = 0x20000, scoped, tag = 'input window, operand 0, single buffered']
    #allocation3 [shape = 's32[1]{0}', space=sflag, size = 0x4, scoped, tag = 'scoped memory for tpu_custom_call.1']
    #allocation4 [shape = 's32[1]{0}', space=sflag, size = 0x4, scoped, tag = 'scoped memory for tpu_custom_call.1']
    #allocation5 [shape = 'u8[12288]{0}', space=vmem, size = 0x3000, scoped, tag = 'input window, operand 1, single buffered']
    #allocation6 [shape = 's32[1]{0}', space=sflag, size = 0x4, scoped, tag = 'scoped memory for tpu_custom_call.1']
    #allocation7 [shape = 'u8[4096]{0}', space=vmem, size = 0x1000, scoped, tag = 'input window, operand 3, single buffered']
    #allocation8 [shape = 'u8[2048]{0}', space=vmem, size = 0x800, scoped, tag = 'output window, operand 0, single buffered']
    %9 = vsyncpa [#allocation3], 0
    %10 = vsyncpa [#allocation6], 0
    %11 = vsyncpa [#allocation4], 0
    // Predicated region
    $region2: #{tpu_custom_call.1} parent=1 // pred_check
      _
    $region3: #{tpu_custom_call.1} parent=1 // pred_check_branch
      %13 = sbr.rel (0) target = $region5
    $region4: #{tpu_custom_call.1} parent=1 // pred_region
      %s15 = ssub.s32 4096, 4096
      %16 = vsyncadd [#allocation3], %s15
      %s17 = sshll.u32 [#allocation2], 4
      %s18 = int_to_ptr.vmem [resolvable:$true] %s17
      %23 = dma.hbm_to_vmem [thread:$0]  %s0, 4096, %s18, [#allocation3], 128, 128, 8
    $region5: #{tpu_custom_call.1} parent=1 // pred_fallthru
      _
    // Predicated region
    $region6: #{tpu_custom_call.1} parent=1 // pred_check
      _
    $region7: #{tpu_custom_call.1} parent=1 // pred_check_branch
      %25 = sbr.rel (0) target = $region9
    $region8: #{tpu_custom_call.1} parent=1 // pred_region
      %s27 = ssub.s32 384, 384
      %28 = vsyncadd [#allocation6], %s27
      %s29 = sshll.u32 [#allocation5], 4
      %s30 = int_to_ptr.vmem [resolvable:$true] %s29
      %35 = dma.hbm_to_vmem [thread:$0]  %s1, 384, %s30, [#allocation6], 128, 128, 8
    $region9: #{tpu_custom_call.1} parent=1 // pred_fallthru
      _
    // Predicated region
    $region10: #{tpu_custom_call.1} parent=1 // pred_check
      _
    $region11: #{tpu_custom_call.1} parent=1 // pred_check_branch
      %37 = sbr.rel (0) target = $region13
    $region12: #{tpu_custom_call.1} parent=1 // pred_region
      _
    $region13: #{tpu_custom_call.1} parent=1 // pred_fallthru
      _
    // Predicated region
    $region14: #{tpu_custom_call.1} parent=1 // pred_check
      _
    $region15: #{tpu_custom_call.1} parent=1 // pred_check_branch
      %39 = sbr.rel (0) target = $region17
    $region16: #{tpu_custom_call.1} parent=1 // pred_region
      %s41 = ssub.s32 128, 128
      %42 = vsyncadd [#allocation6], %s41
      %s44 = sshll.u32 [#allocation7], 4
      %s45 = int_to_ptr.vmem [resolvable:$true] %s44
      %47 = dma.hbm_to_vmem [thread:$0]  %s3, 128, %s45, [#allocation6]
    $region17: #{tpu_custom_call.1} parent=1 // pred_fallthru
      _
    // Predicated region
    $region18: #{tpu_custom_call.1} parent=1 // pred_check
      _
    $region19: #{tpu_custom_call.1} parent=1 // pred_check_branch
      %49 = sbr.rel (0) target = $region21
    $region20: #{tpu_custom_call.1} parent=1 // pred_region
      %50 = dma.done [#allocation3], 4096
    $region21: #{tpu_custom_call.1} parent=1 // pred_fallthru
      _
    // Predicated region
    $region22: #{tpu_custom_call.1} parent=1 // pred_check
      _
    $region23: #{tpu_custom_call.1} parent=1 // pred_check_branch
      %52 = sbr.rel (0) target = $region25
    $region24: #{tpu_custom_call.1} parent=1 // pred_region
      %53 = dma.done [#allocation6], 384
    $region25: #{tpu_custom_call.1} parent=1 // pred_fallthru
      _
    // Predicated region
    $region26: #{tpu_custom_call.1} parent=1 // pred_check
      _
    $region27: #{tpu_custom_call.1} parent=1 // pred_check_branch
      %55 = sbr.rel (0) target = $region29
    $region28: #{tpu_custom_call.1} parent=1 // pred_region
      %56 = dma.done [#allocation6], 128
    $region29: #{tpu_custom_call.1} parent=1 // pred_fallthru
      _
    %v57 = vld [vmem:[%s2] sm:$0x1]
    %v58 = vld [vmem:[#allocation7] sm:$0xff]
    %v59 = vld [vmem:[#allocation2] sm:$0xff]
    %v60 = vld [vmem:[#allocation2 + $0x8] sm:$0xff]
    %v61 = vld [vmem:[#allocation2 + $0x10] sm:$0xff]
    %v62 = vld [vmem:[#allocation2 + $0x18] sm:$0xff]
    %v63 = vld [vmem:[#allocation2 + $0x20] sm:$0xff]
    %v64 = vld [vmem:[#allocation2 + $0x28] sm:$0xff]
    %v65 = vld [vmem:[#allocation2 + $0x30] sm:$0xff]
    %v66 = vld [vmem:[#allocation2 + $0x38] sm:$0xff]
    %v67 = vld [vmem:[#allocation2 + $0x40] sm:$0xff]
    %v68 = vld [vmem:[#allocation2 + $0x48] sm:$0xff]
    %v69 = vld [vmem:[#allocation2 + $0x50] sm:$0xff]
    %v70 = vld [vmem:[#allocation2 + $0x58] sm:$0xff]
    %v71 = vld [vmem:[#allocation2 + $0x60] sm:$0xff]
    %v72 = vld [vmem:[#allocation2 + $0x68] sm:$0xff]
    %v73 = vld [vmem:[#allocation2 + $0x70] sm:$0xff]
    %v74 = vld [vmem:[#allocation2 + $0x78] sm:$0xff]
    %v75 = vld [vmem:[#allocation2 + $0x80] sm:$0xff]
    %v76 = vld [vmem:[#allocation2 + $0x88] sm:$0xff]
    %v77 = vld [vmem:[#allocation2 + $0x90] sm:$0xff]
    %v78 = vld [vmem:[#allocation2 + $0x98] sm:$0xff]
    %v79 = vld [vmem:[#allocation2 + $0xa0] sm:$0xff]
    %v80 = vld [vmem:[#allocation2 + $0xa8] sm:$0xff]
    %v81 = vld [vmem:[#allocation2 + $0xb0] sm:$0xff]
    %v82 = vld [vmem:[#allocation2 + $0xb8] sm:$0xff]
    %v83 = vld [vmem:[#allocation2 + $0xc0] sm:$0xff]
    %v84 = vld [vmem:[#allocation2 + $0xc8] sm:$0xff]
    %v85 = vld [vmem:[#allocation2 + $0xd0] sm:$0xff]
    %v86 = vld [vmem:[#allocation2 + $0xd8] sm:$0xff]
    %v87 = vld [vmem:[#allocation2 + $0xe0] sm:$0xff]
    %v88 = vld [vmem:[#allocation2 + $0xe8] sm:$0xff]
    %v89 = vld [vmem:[#allocation2 + $0xf0] sm:$0xff]
    %v90 = vld [vmem:[#allocation2 + $0xf8] sm:$0xff]
    %v91 = vld [vmem:[#allocation5] sm:$0xff]
    %v92 = vld [vmem:[#allocation5 + $0x8] sm:$0xff]
    %v93 = vld [vmem:[#allocation5 + $0x10] sm:$0xff]
    %vm94 = vcmask 195584
    %v96 = vsel %vm94, %v59, 0
    %v99 = vsel %vm94, %v60, 0
    %v102 = vsel %vm94, %v61, 0
    %v105 = vsel %vm94, %v62, 0
    %v108 = vsel %vm94, %v63, 0
    %v111 = vsel %vm94, %v64, 0
    %v114 = vsel %vm94, %v65, 0
    %v117 = vsel %vm94, %v66, 0
    %v120 = vsel %vm94, %v67, 0
    %v123 = vsel %vm94, %v68, 0
    %v126 = vsel %vm94, %v69, 0
    %v129 = vsel %vm94, %v70, 0
    %v132 = vsel %vm94, %v71, 0
    %v135 = vsel %vm94, %v72, 0
    %v138 = vsel %vm94, %v73, 0
    %v141 = vsel %vm94, %v74, 0
    %v144 = vsel %vm94, %v75, 0
    %v147 = vsel %vm94, %v76, 0
    %v150 = vsel %vm94, %v77, 0
    %v153 = vsel %vm94, %v78, 0
    %v156 = vsel %vm94, %v79, 0
    %v159 = vsel %vm94, %v80, 0
    %v162 = vsel %vm94, %v81, 0
    %v165 = vsel %vm94, %v82, 0
    %v168 = vsel %vm94, %v83, 0
    %v171 = vsel %vm94, %v84, 0
    %v174 = vsel %vm94, %v85, 0
    %v177 = vsel %vm94, %v86, 0
    %v180 = vsel %vm94, %v87, 0
    %v183 = vsel %vm94, %v88, 0
    %v186 = vsel %vm94, %v89, 0
    %v189 = vsel %vm94, %v90, 0
    %191 = vmatprep.subr.mxu0 0.0
    %192 = vmatpush1.msra.mxu0 0.0
    %193 = vmatprep.subr.mxu0 0.0
    %194 = vmatpush1.msra.mxu0 0.0
    %195 = vmatprep.subr.mxu0 0.0
    %196 = vmatpush1.msra.mxu0 0.0
    %197 = vmatprep.subr.mxu0 0.0
    %198 = vmatpush1.msra.mxu0 0.0
    %199 = vmatprep.subr.mxu0 0.0
    %200 = vmatpush1.msra.mxu0 0.0
    %201 = vmatprep.subr.mxu0 0.0
    %202 = vmatpush1.msra.mxu0 0.0
    %203 = vmatprep.subr.mxu0 0.0
    %204 = vmatpush1.msra.mxu0 0.0
    %205 = vmatprep.subr.mxu0 0.0
    %206 = vmatpush1.msra.mxu0 0.0
    %207 = vmatprep.subr.mxu0 0.0
    %208 = vmatpush1.msra.mxu0 0.0
    %209 = vmatprep.subr.mxu0 0.0
    %210 = vmatpush1.msra.mxu0 0.0
    %211 = vmatprep.subr.mxu0 0.0
    %212 = vmatpush1.msra.mxu0 0.0
    %213 = vmatprep.subr.mxu0 0.0
    %214 = vmatpush1.msra.mxu0 0.0
    %215 = vmatprep.subr.mxu0 0.0
    %216 = vmatpush1.msra.mxu0 0.0
    %217 = vmatprep.subr.mxu0 0.0
    %218 = vmatpush1.msra.mxu0 %v93
    %219 = vmatprep.subr.mxu0 0.0
    %220 = vmatpush1.msra.mxu0 %v92
    %221 = vmatprep.subr.mxu0 0.0
    %222 = vmatpush1.msra.mxu0 %v91
    %223 = vmatprep.subr.mxu0 0.0
    %224 = vmatpush2.msra.mxu0 0.0
    %225 = vmatprep.subr.mxu0 0.0
    %226 = vmatpush2.msra.mxu0 0.0
    %227 = vmatprep.subr.mxu0 0.0
    %228 = vmatpush2.msra.mxu0 0.0
    %229 = vmatprep.subr.mxu0 0.0
    %230 = vmatpush2.msra.mxu0 0.0
    %231 = vmatprep.subr.mxu0 0.0
    %232 = vmatpush2.msra.mxu0 0.0
    %233 = vmatprep.subr.mxu0 0.0
    %234 = vmatpush2.msra.mxu0 0.0
    %235 = vmatprep.subr.mxu0 0.0
    %236 = vmatpush2.msra.mxu0 0.0
    %237 = vmatprep.subr.mxu0 0.0
    %238 = vmatpush2.msra.mxu0 0.0
    %239 = vmatprep.subr.mxu0 0.0
    %240 = vmatpush2.msra.mxu0 0.0
    %241 = vmatprep.subr.mxu0 0.0
    %242 = vmatpush2.msra.mxu0 0.0
    %243 = vmatprep.subr.mxu0 0.0
    %244 = vmatpush2.msra.mxu0 0.0
    %245 = vmatprep.subr.mxu0 0.0
    %246 = vmatpush2.msra.mxu0 0.0
    %247 = vmatprep.subr.mxu0 0.0
    %248 = vmatpush2.msra.mxu0 0.0
    %249 = vmatprep.subr.mxu0 0.0
    %250 = vmatpush2.msra.mxu0 0.0
    %251 = vmatprep.subr.mxu0 0.0
    %252 = vmatpush2.msra.mxu0 0.0
    %253 = vmatprep.subr.mxu0 0.0
    %254 = vmatpush2.msra.mxu0 0.0
    %255 = vmatprep.mubr.f32.mxu0 0.0
    %256 = vmatmul.mubr.f32.gmra.mxu0 %v96
    %v257 = vpop.f32.mrf.mxu0
    %v258 = vadd.f32 0.0, %v257
    %v259 = vpop.f32.mrf.mxu0
    %260 = vmatprep.mubr.f32.mxu0 0.0
    %261 = vmatmul.mubr.f32.gmra.mxu0 %v99
    %v262 = vpop.f32.mrf.mxu0
    %v263 = vadd.f32 0.0, %v262
    %v264 = vpop.f32.mrf.mxu0
    %265 = vmatprep.mubr.f32.mxu0 0.0
    %266 = vmatmul.mubr.f32.gmra.mxu0 %v102
    %v267 = vpop.f32.mrf.mxu0
    %v268 = vadd.f32 0.0, %v267
    %v269 = vpop.f32.mrf.mxu0
    %270 = vmatprep.mubr.f32.mxu0 0.0
    %271 = vmatmul.mubr.f32.gmra.mxu0 %v105
    %v272 = vpop.f32.mrf.mxu0
    %v273 = vadd.f32 0.0, %v272
    %v274 = vpop.f32.mrf.mxu0
    %275 = vmatprep.mubr.f32.mxu0 0.0
    %276 = vmatmul.mubr.f32.gmra.mxu0 %v108
    %v277 = vpop.f32.mrf.mxu0
    %v278 = vadd.f32 0.0, %v277
    %v279 = vpop.f32.mrf.mxu0
    %280 = vmatprep.mubr.f32.mxu0 0.0
    %281 = vmatmul.mubr.f32.gmra.mxu0 %v111
    %v282 = vpop.f32.mrf.mxu0
    %v283 = vadd.f32 0.0, %v282
    %v284 = vpop.f32.mrf.mxu0
    %285 = vmatprep.mubr.f32.mxu0 0.0
    %286 = vmatmul.mubr.f32.gmra.mxu0 %v114
    %v287 = vpop.f32.mrf.mxu0
    %v288 = vadd.f32 0.0, %v287
    %v289 = vpop.f32.mrf.mxu0
    %290 = vmatprep.mubr.f32.mxu0 0.0
    %291 = vmatmul.mubr.f32.gmra.mxu0 %v117
    %v292 = vpop.f32.mrf.mxu0
    %v293 = vadd.f32 0.0, %v292
    %v294 = vpop.f32.mrf.mxu0
    %295 = vmatprep.mubr.f32.mxu0 0.0
    %296 = vmatmul.mubr.f32.gmra.mxu0 %v120
    %v297 = vpop.f32.mrf.mxu0
    %v298 = vadd.f32 0.0, %v297
    %v299 = vpop.f32.mrf.mxu0
    %300 = vmatprep.mubr.f32.mxu0 0.0
    %301 = vmatmul.mubr.f32.gmra.mxu0 %v123
    %v302 = vpop.f32.mrf.mxu0
    %v303 = vadd.f32 0.0, %v302
    %v304 = vpop.f32.mrf.mxu0
    %305 = vmatprep.mubr.f32.mxu0 0.0
    %306 = vmatmul.mubr.f32.gmra.mxu0 %v126
    %v307 = vpop.f32.mrf.mxu0
    %v308 = vadd.f32 0.0, %v307
    %v309 = vpop.f32.mrf.mxu0
    %310 = vmatprep.mubr.f32.mxu0 0.0
    %311 = vmatmul.mubr.f32.gmra.mxu0 %v129
    %v312 = vpop.f32.mrf.mxu0
    %v313 = vadd.f32 0.0, %v312
    %v314 = vpop.f32.mrf.mxu0
    %315 = vmatprep.mubr.f32.mxu0 0.0
    %316 = vmatmul.mubr.f32.gmra.mxu0 %v132
    %v317 = vpop.f32.mrf.mxu0
    %v318 = vadd.f32 0.0, %v317
    %v319 = vpop.f32.mrf.mxu0
    %320 = vmatprep.mubr.f32.mxu0 0.0
    %321 = vmatmul.mubr.f32.gmra.mxu0 %v135
    %v322 = vpop.f32.mrf.mxu0
    %v323 = vadd.f32 0.0, %v322
    %v324 = vpop.f32.mrf.mxu0
    %325 = vmatprep.mubr.f32.mxu0 0.0
    %326 = vmatmul.mubr.f32.gmra.mxu0 %v138
    %v327 = vpop.f32.mrf.mxu0
    %v328 = vadd.f32 0.0, %v327
    %v329 = vpop.f32.mrf.mxu0
    %330 = vmatprep.mubr.f32.mxu0 0.0
    %331 = vmatmul.mubr.f32.gmra.mxu0 %v141
    %v332 = vpop.f32.mrf.mxu0
    %v333 = vadd.f32 0.0, %v332
    %v334 = vpop.f32.mrf.mxu0
    %335 = vmatprep.mubr.f32.mxu0 0.0
    %336 = vmatmul.mubr.f32.gmra.mxu0 %v144
    %v337 = vpop.f32.mrf.mxu0
    %v338 = vadd.f32 0.0, %v337
    %v339 = vpop.f32.mrf.mxu0
    %340 = vmatprep.mubr.f32.mxu0 0.0
    %341 = vmatmul.mubr.f32.gmra.mxu0 %v147
    %v342 = vpop.f32.mrf.mxu0
    %v343 = vadd.f32 0.0, %v342
    %v344 = vpop.f32.mrf.mxu0
    %345 = vmatprep.mubr.f32.mxu0 0.0
    %346 = vmatmul.mubr.f32.gmra.mxu0 %v150
    %v347 = vpop.f32.mrf.mxu0
    %v348 = vadd.f32 0.0, %v347
    %v349 = vpop.f32.mrf.mxu0
    %350 = vmatprep.mubr.f32.mxu0 0.0
    %351 = vmatmul.mubr.f32.gmra.mxu0 %v153
    %v352 = vpop.f32.mrf.mxu0
    %v353 = vadd.f32 0.0, %v352
    %v354 = vpop.f32.mrf.mxu0
    %355 = vmatprep.mubr.f32.mxu0 0.0
    %356 = vmatmul.mubr.f32.gmra.mxu0 %v156
    %v357 = vpop.f32.mrf.mxu0
    %v358 = vadd.f32 0.0, %v357
    %v359 = vpop.f32.mrf.mxu0
    %360 = vmatprep.mubr.f32.mxu0 0.0
    %361 = vmatmul.mubr.f32.gmra.mxu0 %v159
    %v362 = vpop.f32.mrf.mxu0
    %v363 = vadd.f32 0.0, %v362
    %v364 = vpop.f32.mrf.mxu0
    %365 = vmatprep.mubr.f32.mxu0 0.0
    %366 = vmatmul.mubr.f32.gmra.mxu0 %v162
    %v367 = vpop.f32.mrf.mxu0
    %v368 = vadd.f32 0.0, %v367
    %v369 = vpop.f32.mrf.mxu0
    %370 = vmatprep.mubr.f32.mxu0 0.0
    %371 = vmatmul.mubr.f32.gmra.mxu0 %v165
    %v372 = vpop.f32.mrf.mxu0
    %v373 = vadd.f32 0.0, %v372
    %v374 = vpop.f32.mrf.mxu0
    %375 = vmatprep.mubr.f32.mxu0 0.0
    %376 = vmatmul.mubr.f32.gmra.mxu0 %v168
    %v377 = vpop.f32.mrf.mxu0
    %v378 = vadd.f32 0.0, %v377
    %v379 = vpop.f32.mrf.mxu0
    %380 = vmatprep.mubr.f32.mxu0 0.0
    %381 = vmatmul.mubr.f32.gmra.mxu0 %v171
    %v382 = vpop.f32.mrf.mxu0
    %v383 = vadd.f32 0.0, %v382
    %v384 = vpop.f32.mrf.mxu0
    %385 = vmatprep.mubr.f32.mxu0 0.0
    %386 = vmatmul.mubr.f32.gmra.mxu0 %v174
    %v387 = vpop.f32.mrf.mxu0
    %v388 = vadd.f32 0.0, %v387
    %v389 = vpop.f32.mrf.mxu0
    %390 = vmatprep.mubr.f32.mxu0 0.0
    %391 = vmatmul.mubr.f32.gmra.mxu0 %v177
    %v392 = vpop.f32.mrf.mxu0
    %v393 = vadd.f32 0.0, %v392
    %v394 = vpop.f32.mrf.mxu0
    %395 = vmatprep.mubr.f32.mxu0 0.0
    %396 = vmatmul.mubr.f32.gmra.mxu0 %v180
    %v397 = vpop.f32.mrf.mxu0
    %v398 = vadd.f32 0.0, %v397
    %v399 = vpop.f32.mrf.mxu0
    %400 = vmatprep.mubr.f32.mxu0 0.0
    %401 = vmatmul.mubr.f32.gmra.mxu0 %v183
    %v402 = vpop.f32.mrf.mxu0
    %v403 = vadd.f32 0.0, %v402
    %v404 = vpop.f32.mrf.mxu0
    %405 = vmatprep.mubr.f32.mxu0 0.0
    %406 = vmatmul.mubr.f32.gmra.mxu0 %v186
    %v407 = vpop.f32.mrf.mxu0
    %v408 = vadd.f32 0.0, %v407
    %v409 = vpop.f32.mrf.mxu0
    %410 = vmatprep.mubr.f32.mxu0 0.0
    %411 = vmatmul.mubr.f32.gmra.mxu0 %v189
    %v412 = vpop.f32.mrf.mxu0
    %v413 = vadd.f32 0.0, %v412
    %v414 = vpop.f32.mrf.mxu0
    %415 = vdwg.mxu0
    %vm448 = vcmask 1046528
    %v449 = vrot.slane %v258, 1
    %v450 = vrot.slane %v263, 1
    %v451 = vsel %vm448, %v449, %v450
    %v452 = vrot.slane %v268, 1
    %v453 = vrot.slane %v273, 1
    %v454 = vsel %vm448, %v452, %v453
    %v455 = vrot.slane %v278, 1
    %v456 = vrot.slane %v283, 1
    %v457 = vsel %vm448, %v455, %v456
    %v458 = vrot.slane %v288, 1
    %v459 = vrot.slane %v293, 1
    %v460 = vsel %vm448, %v458, %v459
    %v461 = vrot.slane %v298, 1
    %v462 = vrot.slane %v303, 1
    %v463 = vsel %vm448, %v461, %v462
    %v464 = vrot.slane %v308, 1
    %v465 = vrot.slane %v313, 1
    %v466 = vsel %vm448, %v464, %v465
    %v467 = vrot.slane %v318, 1
    %v468 = vrot.slane %v323, 1
    %v469 = vsel %vm448, %v467, %v468
    %v470 = vrot.slane %v328, 1
    %v471 = vrot.slane %v333, 1
    %v472 = vsel %vm448, %v470, %v471
    %v473 = vrot.slane %v338, 1
    %v474 = vrot.slane %v343, 1
    %v475 = vsel %vm448, %v473, %v474
    %v476 = vrot.slane %v348, 1
    %v477 = vrot.slane %v353, 1
    %v478 = vsel %vm448, %v476, %v477
    %v479 = vrot.slane %v358, 1
    %v480 = vrot.slane %v363, 1
    %v481 = vsel %vm448, %v479, %v480
    %v482 = vrot.slane %v368, 1
    %v483 = vrot.slane %v373, 1
    %v484 = vsel %vm448, %v482, %v483
    %v485 = vrot.slane %v378, 1
    %v486 = vrot.slane %v383, 1
    %v487 = vsel %vm448, %v485, %v486
    %v488 = vrot.slane %v388, 1
    %v489 = vrot.slane %v393, 1
    %v490 = vsel %vm448, %v488, %v489
    %v491 = vrot.slane %v398, 1
    %v492 = vrot.slane %v403, 1
    %v493 = vsel %vm448, %v491, %v492
    %v494 = vrot.slane %v408, 1
    %v495 = vrot.slane %v413, 1
    %v496 = vsel %vm448, %v494, %v495
    %497 = vrot.lane.b32.xlu0 %v451, 96
    %v498 = vpop.permute.xlu0 %497
    %499 = vrot.lane.b32.xlu0 %v450, 96
    %v500 = vpop.permute.xlu0 %499
    %501 = vrot.lane.b32.xlu0 %v454, 96
    %v502 = vpop.permute.xlu0 %501
    %503 = vrot.lane.b32.xlu0 %v453, 96
    %v504 = vpop.permute.xlu0 %503
    %505 = vrot.lane.b32.xlu0 %v457, 96
    %v506 = vpop.permute.xlu0 %505
    %507 = vrot.lane.b32.xlu0 %v456, 96
    %v508 = vpop.permute.xlu0 %507
    %509 = vrot.lane.b32.xlu0 %v460, 96
    %v510 = vpop.permute.xlu0 %509
    %511 = vrot.lane.b32.xlu0 %v459, 96
    %v512 = vpop.permute.xlu0 %511
    %513 = vrot.lane.b32.xlu0 %v463, 96
    %v514 = vpop.permute.xlu0 %513
    %515 = vrot.lane.b32.xlu0 %v462, 96
    %v516 = vpop.permute.xlu0 %515
    %517 = vrot.lane.b32.xlu0 %v466, 96
    %v518 = vpop.permute.xlu0 %517
    %519 = vrot.lane.b32.xlu0 %v465, 96
    %v520 = vpop.permute.xlu0 %519
    %521 = vrot.lane.b32.xlu0 %v469, 96
    %v522 = vpop.permute.xlu0 %521
    %523 = vrot.lane.b32.xlu0 %v468, 96
    %v524 = vpop.permute.xlu0 %523
    %525 = vrot.lane.b32.xlu0 %v472, 96
    %v526 = vpop.permute.xlu0 %525
    %527 = vrot.lane.b32.xlu0 %v471, 96
    %v528 = vpop.permute.xlu0 %527
    %529 = vrot.lane.b32.xlu0 %v475, 96
    %v530 = vpop.permute.xlu0 %529
    %531 = vrot.lane.b32.xlu0 %v474, 96
    %v532 = vpop.permute.xlu0 %531
    %533 = vrot.lane.b32.xlu0 %v478, 96
    %v534 = vpop.permute.xlu0 %533
    %535 = vrot.lane.b32.xlu0 %v477, 96
    %v536 = vpop.permute.xlu0 %535
    %537 = vrot.lane.b32.xlu0 %v481, 96
    %v538 = vpop.permute.xlu0 %537
    %539 = vrot.lane.b32.xlu0 %v480, 96
    %v540 = vpop.permute.xlu0 %539
    %541 = vrot.lane.b32.xlu0 %v484, 96
    %v542 = vpop.permute.xlu0 %541
    %543 = vrot.lane.b32.xlu0 %v483, 96
    %v544 = vpop.permute.xlu0 %543
    %545 = vrot.lane.b32.xlu0 %v487, 96
    %v546 = vpop.permute.xlu0 %545
    %547 = vrot.lane.b32.xlu0 %v486, 96
    %v548 = vpop.permute.xlu0 %547
    %549 = vrot.lane.b32.xlu0 %v490, 96
    %v550 = vpop.permute.xlu0 %549
    %551 = vrot.lane.b32.xlu0 %v489, 96
    %v552 = vpop.permute.xlu0 %551
    %553 = vrot.lane.b32.xlu0 %v493, 96
    %v554 = vpop.permute.xlu0 %553
    %555 = vrot.lane.b32.xlu0 %v492, 96
    %v556 = vpop.permute.xlu0 %555
    %557 = vrot.lane.b32.xlu0 %v496, 96
    %v558 = vpop.permute.xlu0 %557
    %559 = vrot.lane.b32.xlu0 %v495, 96
    %v560 = vpop.permute.xlu0 %559
    %v593 = vadd.f32 %v258, %v498
    %v594 = vadd.f32 %v263, %v500
    %v595 = vadd.f32 %v268, %v502
    %v596 = vadd.f32 %v273, %v504
    %v597 = vadd.f32 %v278, %v506
    %v598 = vadd.f32 %v283, %v508
    %v599 = vadd.f32 %v288, %v510
    %v600 = vadd.f32 %v293, %v512
    %v601 = vadd.f32 %v298, %v514
    %v602 = vadd.f32 %v303, %v516
    %v603 = vadd.f32 %v308, %v518
    %v604 = vadd.f32 %v313, %v520
    %v605 = vadd.f32 %v318, %v522
    %v606 = vadd.f32 %v323, %v524
    %v607 = vadd.f32 %v328, %v526
    %v608 = vadd.f32 %v333, %v528
    %v609 = vadd.f32 %v338, %v530
    %v610 = vadd.f32 %v343, %v532
    %v611 = vadd.f32 %v348, %v534
    %v612 = vadd.f32 %v353, %v536
    %v613 = vadd.f32 %v358, %v538
    %v614 = vadd.f32 %v363, %v540
    %v615 = vadd.f32 %v368, %v542
    %v616 = vadd.f32 %v373, %v544
    %v617 = vadd.f32 %v378, %v546
    %v618 = vadd.f32 %v383, %v548
    %v619 = vadd.f32 %v388, %v550
    %v620 = vadd.f32 %v393, %v552
    %v621 = vadd.f32 %v398, %v554
    %v622 = vadd.f32 %v403, %v556
    %v623 = vadd.f32 %v408, %v558
    %v624 = vadd.f32 %v413, %v560
    %vm625 = vcmask 1045504
    %v626 = vrot.slane %v258, 2
    %v627 = vrot.slane %v263, 2
    %v628 = vsel %vm625, %v626, %v627
    %v629 = vrot.slane %v268, 2
    %v630 = vrot.slane %v273, 2
    %v631 = vsel %vm625, %v629, %v630
    %v632 = vrot.slane %v278, 2
    %v633 = vrot.slane %v283, 2
    %v634 = vsel %vm625, %v632, %v633
    %v635 = vrot.slane %v288, 2
    %v636 = vrot.slane %v293, 2
    %v637 = vsel %vm625, %v635, %v636
    %v638 = vrot.slane %v298, 2
    %v639 = vrot.slane %v303, 2
    %v640 = vsel %vm625, %v638, %v639
    %v641 = vrot.slane %v308, 2
    %v642 = vrot.slane %v313, 2
    %v643 = vsel %vm625, %v641, %v642
    %v644 = vrot.slane %v318, 2
    %v645 = vrot.slane %v323, 2
    %v646 = vsel %vm625, %v644, %v645
    %v647 = vrot.slane %v328, 2
    %v648 = vrot.slane %v333, 2
    %v649 = vsel %vm625, %v647, %v648
    %v650 = vrot.slane %v338, 2
    %v651 = vrot.slane %v343, 2
    %v652 = vsel %vm625, %v650, %v651
    %v653 = vrot.slane %v348, 2
    %v654 = vrot.slane %v353, 2
    %v655 = vsel %vm625, %v653, %v654
    %v656 = vrot.slane %v358, 2
    %v657 = vrot.slane %v363, 2
    %v658 = vsel %vm625, %v656, %v657
    %v659 = vrot.slane %v368, 2
    %v660 = vrot.slane %v373, 2
    %v661 = vsel %vm625, %v659, %v660
    %v662 = vrot.slane %v378, 2
    %v663 = vrot.slane %v383, 2
    %v664 = vsel %vm625, %v662, %v663
    %v665 = vrot.slane %v388, 2
    %v666 = vrot.slane %v393, 2
    %v667 = vsel %vm625, %v665, %v666
    %v668 = vrot.slane %v398, 2
    %v669 = vrot.slane %v403, 2
    %v670 = vsel %vm625, %v668, %v669
    %v671 = vrot.slane %v408, 2
    %v672 = vrot.slane %v413, 2
    %v673 = vsel %vm625, %v671, %v672
    %674 = vrot.lane.b32.xlu0 %v628, 64
    %v675 = vpop.permute.xlu0 %674
    %676 = vrot.lane.b32.xlu0 %v627, 64
    %v677 = vpop.permute.xlu0 %676
    %678 = vrot.lane.b32.xlu0 %v631, 64
    %v679 = vpop.permute.xlu0 %678
    %680 = vrot.lane.b32.xlu0 %v630, 64
    %v681 = vpop.permute.xlu0 %680
    %682 = vrot.lane.b32.xlu0 %v634, 64
    %v683 = vpop.permute.xlu0 %682
    %684 = vrot.lane.b32.xlu0 %v633, 64
    %v685 = vpop.permute.xlu0 %684
    %686 = vrot.lane.b32.xlu0 %v637, 64
    %v687 = vpop.permute.xlu0 %686
    %688 = vrot.lane.b32.xlu0 %v636, 64
    %v689 = vpop.permute.xlu0 %688
    %690 = vrot.lane.b32.xlu0 %v640, 64
    %v691 = vpop.permute.xlu0 %690
    %692 = vrot.lane.b32.xlu0 %v639, 64
    %v693 = vpop.permute.xlu0 %692
    %694 = vrot.lane.b32.xlu0 %v643, 64
    %v695 = vpop.permute.xlu0 %694
    %696 = vrot.lane.b32.xlu0 %v642, 64
    %v697 = vpop.permute.xlu0 %696
    %698 = vrot.lane.b32.xlu0 %v646, 64
    %v699 = vpop.permute.xlu0 %698
    %700 = vrot.lane.b32.xlu0 %v645, 64
    %v701 = vpop.permute.xlu0 %700
    %702 = vrot.lane.b32.xlu0 %v649, 64
    %v703 = vpop.permute.xlu0 %702
    %704 = vrot.lane.b32.xlu0 %v648, 64
    %v705 = vpop.permute.xlu0 %704
    %706 = vrot.lane.b32.xlu0 %v652, 64
    %v707 = vpop.permute.xlu0 %706
    %708 = vrot.lane.b32.xlu0 %v651, 64
    %v709 = vpop.permute.xlu0 %708
    %710 = vrot.lane.b32.xlu0 %v655, 64
    %v711 = vpop.permute.xlu0 %710
    %712 = vrot.lane.b32.xlu0 %v654, 64
    %v713 = vpop.permute.xlu0 %712
    %714 = vrot.lane.b32.xlu0 %v658, 64
    %v715 = vpop.permute.xlu0 %714
    %716 = vrot.lane.b32.xlu0 %v657, 64
    %v717 = vpop.permute.xlu0 %716
    %718 = vrot.lane.b32.xlu0 %v661, 64
    %v719 = vpop.permute.xlu0 %718
    %720 = vrot.lane.b32.xlu0 %v660, 64
    %v721 = vpop.permute.xlu0 %720
    %722 = vrot.lane.b32.xlu0 %v664, 64
    %v723 = vpop.permute.xlu0 %722
    %724 = vrot.lane.b32.xlu0 %v663, 64
    %v725 = vpop.permute.xlu0 %724
    %726 = vrot.lane.b32.xlu0 %v667, 64
    %v727 = vpop.permute.xlu0 %726
    %728 = vrot.lane.b32.xlu0 %v666, 64
    %v729 = vpop.permute.xlu0 %728
    %730 = vrot.lane.b32.xlu0 %v670, 64
    %v731 = vpop.permute.xlu0 %730
    %732 = vrot.lane.b32.xlu0 %v669, 64
    %v733 = vpop.permute.xlu0 %732
    %734 = vrot.lane.b32.xlu0 %v673, 64
    %v735 = vpop.permute.xlu0 %734
    %736 = vrot.lane.b32.xlu0 %v672, 64
    %v737 = vpop.permute.xlu0 %736
    %v770 = vadd.f32 %v593, %v675
    %v771 = vadd.f32 %v594, %v677
    %v772 = vadd.f32 %v595, %v679
    %v773 = vadd.f32 %v596, %v681
    %v774 = vadd.f32 %v597, %v683
    %v775 = vadd.f32 %v598, %v685
    %v776 = vadd.f32 %v599, %v687
    %v777 = vadd.f32 %v600, %v689
    %v778 = vadd.f32 %v601, %v691
    %v779 = vadd.f32 %v602, %v693
    %v780 = vadd.f32 %v603, %v695
    %v781 = vadd.f32 %v604, %v697
    %v782 = vadd.f32 %v605, %v699
    %v783 = vadd.f32 %v606, %v701
    %v784 = vadd.f32 %v607, %v703
    %v785 = vadd.f32 %v608, %v705
    %v786 = vadd.f32 %v609, %v707
    %v787 = vadd.f32 %v610, %v709
    %v788 = vadd.f32 %v611, %v711
    %v789 = vadd.f32 %v612, %v713
    %v790 = vadd.f32 %v613, %v715
    %v791 = vadd.f32 %v614, %v717
    %v792 = vadd.f32 %v615, %v719
    %v793 = vadd.f32 %v616, %v721
    %v794 = vadd.f32 %v617, %v723
    %v795 = vadd.f32 %v618, %v725
    %v796 = vadd.f32 %v619, %v727
    %v797 = vadd.f32 %v620, %v729
    %v798 = vadd.f32 %v621, %v731
    %v799 = vadd.f32 %v622, %v733
    %v800 = vadd.f32 %v623, %v735
    %v801 = vadd.f32 %v624, %v737
    %vm802 = vcmask 261120
    %v803 = vsel %vm802, %v770, -inf
    %vm804 = vcmask 259072
    %v805 = vsel %vm804, %v771, -inf
    %v806 = vmax.f32 %v803, %v805
    %v807 = vrot.slane %v806, 4
    %v808 = vmax.f32 %v806, %v807
    %v809 = vrot.slane %v808, 2
    %v810 = vmax.f32 %v808, %v809
    %v811 = vrot.slane %v810, 1
    %v812 = vmax.f32 %v810, %v811
    %v813 = vsel %vm802, %v772, -inf
    %v814 = vsel %vm804, %v773, -inf
    %v815 = vmax.f32 %v813, %v814
    %v816 = vrot.slane %v815, 4
    %v817 = vmax.f32 %v815, %v816
    %v818 = vrot.slane %v817, 2
    %v819 = vmax.f32 %v817, %v818
    %v820 = vrot.slane %v819, 1
    %v821 = vmax.f32 %v819, %v820
    %v822 = vsel %vm802, %v774, -inf
    %v823 = vsel %vm804, %v775, -inf
    %v824 = vmax.f32 %v822, %v823
    %v825 = vrot.slane %v824, 4
    %v826 = vmax.f32 %v824, %v825
    %v827 = vrot.slane %v826, 2
    %v828 = vmax.f32 %v826, %v827
    %v829 = vrot.slane %v828, 1
    %v830 = vmax.f32 %v828, %v829
    %v831 = vsel %vm802, %v776, -inf
    %v832 = vsel %vm804, %v777, -inf
    %v833 = vmax.f32 %v831, %v832
    %v834 = vrot.slane %v833, 4
    %v835 = vmax.f32 %v833, %v834
    %v836 = vrot.slane %v835, 2
    %v837 = vmax.f32 %v835, %v836
    %v838 = vrot.slane %v837, 1
    %v839 = vmax.f32 %v837, %v838
    %v840 = vsel %vm802, %v778, -inf
    %v841 = vsel %vm804, %v779, -inf
    %v842 = vmax.f32 %v840, %v841
    %v843 = vrot.slane %v842, 4
    %v844 = vmax.f32 %v842, %v843
    %v845 = vrot.slane %v844, 2
    %v846 = vmax.f32 %v844, %v845
    %v847 = vrot.slane %v846, 1
    %v848 = vmax.f32 %v846, %v847
    %v849 = vsel %vm802, %v780, -inf
    %v850 = vsel %vm804, %v781, -inf
    %v851 = vmax.f32 %v849, %v850
    %v852 = vrot.slane %v851, 4
    %v853 = vmax.f32 %v851, %v852
    %v854 = vrot.slane %v853, 2
    %v855 = vmax.f32 %v853, %v854
    %v856 = vrot.slane %v855, 1
    %v857 = vmax.f32 %v855, %v856
    %v858 = vsel %vm802, %v782, -inf
    %v859 = vsel %vm804, %v783, -inf
    %v860 = vmax.f32 %v858, %v859
    %v861 = vrot.slane %v860, 4
    %v862 = vmax.f32 %v860, %v861
    %v863 = vrot.slane %v862, 2
    %v864 = vmax.f32 %v862, %v863
    %v865 = vrot.slane %v864, 1
    %v866 = vmax.f32 %v864, %v865
    %v867 = vsel %vm802, %v784, -inf
    %v868 = vsel %vm804, %v785, -inf
    %v869 = vmax.f32 %v867, %v868
    %v870 = vrot.slane %v869, 4
    %v871 = vmax.f32 %v869, %v870
    %v872 = vrot.slane %v871, 2
    %v873 = vmax.f32 %v871, %v872
    %v874 = vrot.slane %v873, 1
    %v875 = vmax.f32 %v873, %v874
    %v876 = vsel %vm802, %v786, -inf
    %v877 = vsel %vm804, %v787, -inf
    %v878 = vmax.f32 %v876, %v877
    %v879 = vrot.slane %v878, 4
    %v880 = vmax.f32 %v878, %v879
    %v881 = vrot.slane %v880, 2
    %v882 = vmax.f32 %v880, %v881
    %v883 = vrot.slane %v882, 1
    %v884 = vmax.f32 %v882, %v883
    %v885 = vsel %vm802, %v788, -inf
    %v886 = vsel %vm804, %v789, -inf
    %v887 = vmax.f32 %v885, %v886
    %v888 = vrot.slane %v887, 4
    %v889 = vmax.f32 %v887, %v888
    %v890 = vrot.slane %v889, 2
    %v891 = vmax.f32 %v889, %v890
    %v892 = vrot.slane %v891, 1
    %v893 = vmax.f32 %v891, %v892
    %v894 = vsel %vm802, %v790, -inf
    %v895 = vsel %vm804, %v791, -inf
    %v896 = vmax.f32 %v894, %v895
    %v897 = vrot.slane %v896, 4
    %v898 = vmax.f32 %v896, %v897
    %v899 = vrot.slane %v898, 2
    %v900 = vmax.f32 %v898, %v899
    %v901 = vrot.slane %v900, 1
    %v902 = vmax.f32 %v900, %v901
    %v903 = vsel %vm802, %v792, -inf
    %v904 = vsel %vm804, %v793, -inf
    %v905 = vmax.f32 %v903, %v904
    %v906 = vrot.slane %v905, 4
    %v907 = vmax.f32 %v905, %v906
    %v908 = vrot.slane %v907, 2
    %v909 = vmax.f32 %v907, %v908
    %v910 = vrot.slane %v909, 1
    %v911 = vmax.f32 %v909, %v910
    %v912 = vsel %vm802, %v794, -inf
    %v913 = vsel %vm804, %v795, -inf
    %v914 = vmax.f32 %v912, %v913
    %v915 = vrot.slane %v914, 4
    %v916 = vmax.f32 %v914, %v915
    %v917 = vrot.slane %v916, 2
    %v918 = vmax.f32 %v916, %v917
    %v919 = vrot.slane %v918, 1
    %v920 = vmax.f32 %v918, %v919
    %v921 = vsel %vm802, %v796, -inf
    %v922 = vsel %vm804, %v797, -inf
    %v923 = vmax.f32 %v921, %v922
    %v924 = vrot.slane %v923, 4
    %v925 = vmax.f32 %v923, %v924
    %v926 = vrot.slane %v925, 2
    %v927 = vmax.f32 %v925, %v926
    %v928 = vrot.slane %v927, 1
    %v929 = vmax.f32 %v927, %v928
    %v930 = vsel %vm802, %v798, -inf
    %v931 = vsel %vm804, %v799, -inf
    %v932 = vmax.f32 %v930, %v931
    %v933 = vrot.slane %v932, 4
    %v934 = vmax.f32 %v932, %v933
    %v935 = vrot.slane %v934, 2
    %v936 = vmax.f32 %v934, %v935
    %v937 = vrot.slane %v936, 1
    %v938 = vmax.f32 %v936, %v937
    %v939 = vsel %vm802, %v800, -inf
    %v940 = vsel %vm804, %v801, -inf
    %v941 = vmax.f32 %v939, %v940
    %v942 = vrot.slane %v941, 4
    %v943 = vmax.f32 %v941, %v942
    %v944 = vrot.slane %v943, 2
    %v945 = vmax.f32 %v943, %v944
    %v946 = vrot.slane %v945, 1
    %v947 = vmax.f32 %v945, %v946
    %v949 = vlaneseq
    %v950 = vshrl.u32 %v949, 7
    %v951 = vsub.s32 0, %v950
    %v952 = vrot.slane %v57, %v951
    %v954 = vadd.f32 %v812, %v952
    %v955 = vadd.f32 %v821, %v952
    %v956 = vadd.f32 %v830, %v952
    %v957 = vadd.f32 %v839, %v952
    %v958 = vadd.f32 %v848, %v952
    %v959 = vadd.f32 %v857, %v952
    %v960 = vadd.f32 %v866, %v952
    %v961 = vadd.f32 %v875, %v952
    %v962 = vadd.f32 %v884, %v952
    %v963 = vadd.f32 %v893, %v952
    %v964 = vadd.f32 %v902, %v952
    %v965 = vadd.f32 %v911, %v952
    %v966 = vadd.f32 %v920, %v952
    %v967 = vadd.f32 %v929, %v952
    %v968 = vadd.f32 %v938, %v952
    %v969 = vadd.f32 %v947, %v952
    %v970 = vtanh.pop %v954
    %v971 = vtanh.pop %v955
    %v972 = vtanh.pop %v956
    %v973 = vtanh.pop %v957
    %v974 = vtanh.pop %v958
    %v975 = vtanh.pop %v959
    %v976 = vtanh.pop %v960
    %v977 = vtanh.pop %v961
    %v978 = vtanh.pop %v962
    %v979 = vtanh.pop %v963
    %v980 = vtanh.pop %v964
    %v981 = vtanh.pop %v965
    %v982 = vtanh.pop %v966
    %v983 = vtanh.pop %v967
    %v984 = vtanh.pop %v968
    %v985 = vtanh.pop %v969
    %v1002 = vrot.slane %v971, 7
    %vm1003 = vcmask 1041409
    %v1004 = vsel %vm1003, %v1002, %v970
    %v1005 = vrot.slane %v972, 6
    %vm1006 = vcmask 1042434
    %v1007 = vsel %vm1006, %v1005, %v1004
    %v1008 = vrot.slane %v973, 5
    %vm1009 = vcmask 1043459
    %v1010 = vsel %vm1009, %v1008, %v1007
    %v1011 = vrot.slane %v974, 4
    %vm1012 = vcmask 1044484
    %v1013 = vsel %vm1012, %v1011, %v1010
    %v1014 = vrot.slane %v975, 3
    %vm1015 = vcmask 1045509
    %v1016 = vsel %vm1015, %v1014, %v1013
    %v1017 = vrot.slane %v976, 2
    %vm1018 = vcmask 1046534
    %v1019 = vsel %vm1018, %v1017, %v1016
    %v1020 = vrot.slane %v977, 1
    %vm1021 = vcmask 1047559
    %v1022 = vsel %vm1021, %v1020, %v1019
    %v1023 = vrot.slane %v979, 7
    %v1024 = vsel %vm1003, %v1023, %v978
    %v1025 = vrot.slane %v980, 6
    %v1026 = vsel %vm1006, %v1025, %v1024
    %v1027 = vrot.slane %v981, 5
    %v1028 = vsel %vm1009, %v1027, %v1026
    %v1029 = vrot.slane %v982, 4
    %v1030 = vsel %vm1012, %v1029, %v1028
    %v1031 = vrot.slane %v983, 3
    %v1032 = vsel %vm1015, %v1031, %v1030
    %v1033 = vrot.slane %v984, 2
    %v1034 = vsel %vm1018, %v1033, %v1032
    %v1035 = vrot.slane %v985, 1
    %v1036 = vsel %vm1021, %v1035, %v1034
    %v1037 = vsel %vm802, %v1022, 0
    %v1039 = vsel %vm802, %v1036, 0
    %v1042 = vsel %vm802, %v58, 0
    %1044 = vmatprep.subr.mxu0 0.0
    %1045 = vmatpush1.xpose.msra.mxu0 0.0
    %1046 = vmatprep.subr.mxu0 0.0
    %1047 = vmatpush1.xpose.msra.mxu0 0.0
    %1048 = vmatprep.subr.mxu0 0.0
    %1049 = vmatpush1.xpose.msra.mxu0 0.0
    %1050 = vmatprep.subr.mxu0 0.0
    %1051 = vmatpush1.xpose.msra.mxu0 0.0
    %1052 = vmatprep.subr.mxu0 0.0
    %1053 = vmatpush1.xpose.msra.mxu0 0.0
    %1054 = vmatprep.subr.mxu0 0.0
    %1055 = vmatpush1.xpose.msra.mxu0 0.0
    %1056 = vmatprep.subr.mxu0 0.0
    %1057 = vmatpush1.xpose.msra.mxu0 0.0
    %1058 = vmatprep.subr.mxu0 0.0
    %1059 = vmatpush1.xpose.msra.mxu0 0.0
    %1060 = vmatprep.subr.mxu0 0.0
    %1061 = vmatpush1.xpose.msra.mxu0 0.0
    %1062 = vmatprep.subr.mxu0 0.0
    %1063 = vmatpush1.xpose.msra.mxu0 0.0
    %1064 = vmatprep.subr.mxu0 0.0
    %1065 = vmatpush1.xpose.msra.mxu0 0.0
    %1066 = vmatprep.subr.mxu0 0.0
    %1067 = vmatpush1.xpose.msra.mxu0 0.0
    %1068 = vmatprep.subr.mxu0 0.0
    %1069 = vmatpush1.xpose.msra.mxu0 0.0
    %1070 = vmatprep.subr.mxu0 0.0
    %1071 = vmatpush1.xpose.msra.mxu0 0.0
    %1072 = vmatprep.subr.mxu0 0.0
    %1073 = vmatpush1.xpose.msra.mxu0 0.0
    %1074 = vmatprep.subr.mxu0 0.0
    %1075 = vmatpush1.xpose.msra.mxu0 %v1042
    %1076 = vmatprep.subr.mxu0 0.0
    %1077 = vmatpush2.xpose.msra.mxu0 0.0
    %1078 = vmatprep.subr.mxu0 0.0
    %1079 = vmatpush2.xpose.msra.mxu0 0.0
    %1080 = vmatprep.subr.mxu0 0.0
    %1081 = vmatpush2.xpose.msra.mxu0 0.0
    %1082 = vmatprep.subr.mxu0 0.0
    %1083 = vmatpush2.xpose.msra.mxu0 0.0
    %1084 = vmatprep.subr.mxu0 0.0
    %1085 = vmatpush2.xpose.msra.mxu0 0.0
    %1086 = vmatprep.subr.mxu0 0.0
    %1087 = vmatpush2.xpose.msra.mxu0 0.0
    %1088 = vmatprep.subr.mxu0 0.0
    %1089 = vmatpush2.xpose.msra.mxu0 0.0
    %1090 = vmatprep.subr.mxu0 0.0
    %1091 = vmatpush2.xpose.msra.mxu0 0.0
    %1092 = vmatprep.subr.mxu0 0.0
    %1093 = vmatpush2.xpose.msra.mxu0 0.0
    %1094 = vmatprep.subr.mxu0 0.0
    %1095 = vmatpush2.xpose.msra.mxu0 0.0
    %1096 = vmatprep.subr.mxu0 0.0
    %1097 = vmatpush2.xpose.msra.mxu0 0.0
    %1098 = vmatprep.subr.mxu0 0.0
    %1099 = vmatpush2.xpose.msra.mxu0 0.0
    %1100 = vmatprep.subr.mxu0 0.0
    %1101 = vmatpush2.xpose.msra.mxu0 0.0
    %1102 = vmatprep.subr.mxu0 0.0
    %1103 = vmatpush2.xpose.msra.mxu0 0.0
    %1104 = vmatprep.subr.mxu0 0.0
    %1105 = vmatpush2.xpose.msra.mxu0 0.0
    %1106 = vmatprep.subr.mxu0 0.0
    %1107 = vmatpush2.xpose.msra.mxu0 0.0
    %1108 = vmatprep.mubr.f32.mxu0 0.0
    %1109 = vmatmul.mubr.f32.gmra.mxu0 %v1037
    %v1110 = vpop.f32.mrf.mxu0
    %v1111 = vadd.f32 0.0, %v1110
    %v1112 = vpop.f32.mrf.mxu0
    %1113 = vmatprep.mubr.f32.mxu0 0.0
    %1114 = vmatmul.mubr.f32.gmra.mxu0 %v1039
    %v1115 = vpop.f32.mrf.mxu0
    %v1116 = vadd.f32 0.0, %v1115
    %v1117 = vpop.f32.mrf.mxu0
    %1118 = vdwg.mxu0
    %v1121 = vcombine.high %v1111, %v1111
    %v1122 = vcombine.high %v1116, %v1116
    %vm1125 = vcmask 60416
    %v1126 = vsel %vm1125, %v1111, -inf
    %v1127 = vrot.slane %v1126, 4
    %v1128 = vmax.f32 %v1126, %v1127
    %v1129 = vrot.slane %v1128, 2
    %v1130 = vmax.f32 %v1128, %v1129
    %v1131 = vrot.slane %v1130, 1
    %v1132 = vmax.f32 %v1130, %v1131
    %v1133 = vsel %vm1125, %v1121, -inf
    %v1134 = vrot.slane %v1133, 4
    %v1135 = vmax.f32 %v1133, %v1134
    %v1136 = vrot.slane %v1135, 2
    %v1137 = vmax.f32 %v1135, %v1136
    %v1138 = vrot.slane %v1137, 1
    %v1139 = vmax.f32 %v1137, %v1138
    %v1140 = vsel %vm1125, %v1116, -inf
    %v1141 = vrot.slane %v1140, 4
    %v1142 = vmax.f32 %v1140, %v1141
    %v1143 = vrot.slane %v1142, 2
    %v1144 = vmax.f32 %v1142, %v1143
    %v1145 = vrot.slane %v1144, 1
    %v1146 = vmax.f32 %v1144, %v1145
    %v1147 = vsel %vm1125, %v1122, -inf
    %v1148 = vrot.slane %v1147, 4
    %v1149 = vmax.f32 %v1147, %v1148
    %v1150 = vrot.slane %v1149, 2
    %v1151 = vmax.f32 %v1149, %v1150
    %v1152 = vrot.slane %v1151, 1
    %v1153 = vmax.f32 %v1151, %v1152
    %v1154 = vsub.f32 %v1111, %v1132
    %v1155 = vsub.f32 %v1121, %v1139
    %v1156 = vsub.f32 %v1116, %v1146
    %v1157 = vsub.f32 %v1122, %v1153
    %v1158 = vmul.f32 %v1154, 1.442695
    %v1159 = vpow.pop %v1158
    %v1160 = vmul.f32 %v1155, 1.442695
    %v1161 = vpow.pop %v1160
    %v1162 = vmul.f32 %v1156, 1.442695
    %v1163 = vpow.pop %v1162
    %v1164 = vmul.f32 %v1157, 1.442695
    %v1165 = vpow.pop %v1164
    %v1166 = vsel %vm1125, %v1159, 0.0
    %v1167 = vrot.slane %v1166, 4
    %v1168 = vadd.f32 %v1166, %v1167
    %v1169 = vrot.slane %v1168, 2
    %v1170 = vadd.f32 %v1168, %v1169
    %v1171 = vrot.slane %v1170, 1
    %v1172 = vadd.f32 %v1170, %v1171
    %v1173 = vsel %vm1125, %v1161, 0.0
    %v1174 = vrot.slane %v1173, 4
    %v1175 = vadd.f32 %v1173, %v1174
    %v1176 = vrot.slane %v1175, 2
    %v1177 = vadd.f32 %v1175, %v1176
    %v1178 = vrot.slane %v1177, 1
    %v1179 = vadd.f32 %v1177, %v1178
    %v1180 = vsel %vm1125, %v1163, 0.0
    %v1181 = vrot.slane %v1180, 4
    %v1182 = vadd.f32 %v1180, %v1181
    %v1183 = vrot.slane %v1182, 2
    %v1184 = vadd.f32 %v1182, %v1183
    %v1185 = vrot.slane %v1184, 1
    %v1186 = vadd.f32 %v1184, %v1185
    %v1187 = vsel %vm1125, %v1165, 0.0
    %v1188 = vrot.slane %v1187, 4
    %v1189 = vadd.f32 %v1187, %v1188
    %v1190 = vrot.slane %v1189, 2
    %v1191 = vadd.f32 %v1189, %v1190
    %v1192 = vrot.slane %v1191, 1
    %v1193 = vadd.f32 %v1191, %v1192
    %v1194 = vrcp.pop %v1172
    %v1195 = vmul.f32 %v1159, %v1194
    %v1196 = vrcp.pop %v1179
    %v1197 = vmul.f32 %v1161, %v1196
    %v1198 = vrcp.pop %v1186
    %v1199 = vmul.f32 %v1163, %v1198
    %v1200 = vrcp.pop %v1193
    %v1201 = vmul.f32 %v1165, %v1200
    %v1202 = vlaneseq
    %v1203 = vshrl.u32 %v1202, 7
    %v1204 = vsub.s32 0, %v1203
    %v1205 = vrot.slane %v1195, %v1204
    %1207 = vbcast.lane.b32.xlu0 %v1205, 256
    %v1208 = vpop.permute.xlu0 %1207
    %v1209 = vlaneseq
    %v1210 = vshrl.u32 %v1209, 7
    %v1211 = vsub.s32 1, %v1210
    %v1212 = vrot.slane %v1195, %v1211
    %1214 = vbcast.lane.b32.xlu0 %v1212, 256
    %v1215 = vpop.permute.xlu0 %1214
    %v1216 = vlaneseq
    %v1217 = vshrl.u32 %v1216, 7
    %v1218 = vsub.s32 2, %v1217
    %v1219 = vrot.slane %v1195, %v1218
    %1221 = vbcast.lane.b32.xlu0 %v1219, 256
    %v1222 = vpop.permute.xlu0 %1221
    %v1223 = vlaneseq
    %v1224 = vshrl.u32 %v1223, 7
    %v1225 = vsub.s32 3, %v1224
    %v1226 = vrot.slane %v1195, %v1225
    %1228 = vbcast.lane.b32.xlu0 %v1226, 256
    %v1229 = vpop.permute.xlu0 %1228
    %v1230 = vlaneseq
    %v1231 = vshrl.u32 %v1230, 7
    %v1232 = vsub.s32 0, %v1231
    %v1233 = vrot.slane %v1197, %v1232
    %1235 = vbcast.lane.b32.xlu0 %v1233, 256
    %v1236 = vpop.permute.xlu0 %1235
    %v1237 = vlaneseq
    %v1238 = vshrl.u32 %v1237, 7
    %v1239 = vsub.s32 1, %v1238
    %v1240 = vrot.slane %v1197, %v1239
    %1242 = vbcast.lane.b32.xlu0 %v1240, 256
    %v1243 = vpop.permute.xlu0 %1242
    %v1244 = vlaneseq
    %v1245 = vshrl.u32 %v1244, 7
    %v1246 = vsub.s32 2, %v1245
    %v1247 = vrot.slane %v1197, %v1246
    %1249 = vbcast.lane.b32.xlu0 %v1247, 256
    %v1250 = vpop.permute.xlu0 %1249
    %v1251 = vlaneseq
    %v1252 = vshrl.u32 %v1251, 7
    %v1253 = vsub.s32 3, %v1252
    %v1254 = vrot.slane %v1197, %v1253
    %1256 = vbcast.lane.b32.xlu0 %v1254, 256
    %v1257 = vpop.permute.xlu0 %1256
    %v1258 = vlaneseq
    %v1259 = vshrl.u32 %v1258, 7
    %v1260 = vsub.s32 0, %v1259
    %v1261 = vrot.slane %v1199, %v1260
    %1263 = vbcast.lane.b32.xlu0 %v1261, 256
    %v1264 = vpop.permute.xlu0 %1263
    %v1265 = vlaneseq
    %v1266 = vshrl.u32 %v1265, 7
    %v1267 = vsub.s32 1, %v1266
    %v1268 = vrot.slane %v1199, %v1267
    %1270 = vbcast.lane.b32.xlu0 %v1268, 256
    %v1271 = vpop.permute.xlu0 %1270
    %v1272 = vlaneseq
    %v1273 = vshrl.u32 %v1272, 7
    %v1274 = vsub.s32 2, %v1273
    %v1275 = vrot.slane %v1199, %v1274
    %1277 = vbcast.lane.b32.xlu0 %v1275, 256
    %v1278 = vpop.permute.xlu0 %1277
    %v1279 = vlaneseq
    %v1280 = vshrl.u32 %v1279, 7
    %v1281 = vsub.s32 3, %v1280
    %v1282 = vrot.slane %v1199, %v1281
    %1284 = vbcast.lane.b32.xlu0 %v1282, 256
    %v1285 = vpop.permute.xlu0 %1284
    %v1286 = vlaneseq
    %v1287 = vshrl.u32 %v1286, 7
    %v1288 = vsub.s32 0, %v1287
    %v1289 = vrot.slane %v1201, %v1288
    %1291 = vbcast.lane.b32.xlu0 %v1289, 256
    %v1292 = vpop.permute.xlu0 %1291
    %v1293 = vlaneseq
    %v1294 = vshrl.u32 %v1293, 7
    %v1295 = vsub.s32 1, %v1294
    %v1296 = vrot.slane %v1201, %v1295
    %1298 = vbcast.lane.b32.xlu0 %v1296, 256
    %v1299 = vpop.permute.xlu0 %1298
    %v1300 = vlaneseq
    %v1301 = vshrl.u32 %v1300, 7
    %v1302 = vsub.s32 2, %v1301
    %v1303 = vrot.slane %v1201, %v1302
    %1305 = vbcast.lane.b32.xlu0 %v1303, 256
    %v1306 = vpop.permute.xlu0 %1305
    %v1307 = vlaneseq
    %v1308 = vshrl.u32 %v1307, 7
    %v1309 = vsub.s32 3, %v1308
    %v1310 = vrot.slane %v1201, %v1309
    %1312 = vbcast.lane.b32.xlu0 %v1310, 256
    %v1313 = vpop.permute.xlu0 %1312
    %v1314 = vlaneseq
    %v1315 = vshrl.u32 %v1314, 7
    %v1316 = vsub.s32 0, %v1315
    %v1317 = vrot.slane %v970, %v1316
    %v1318 = vlaneseq
    %v1319 = vshrl.u32 %v1318, 7
    %v1320 = vsub.s32 0, %v1319
    %v1321 = vrot.slane %v971, %v1320
    %v1322 = vlaneseq
    %v1323 = vshrl.u32 %v1322, 7
    %v1324 = vsub.s32 0, %v1323
    %v1325 = vrot.slane %v972, %v1324
    %v1326 = vlaneseq
    %v1327 = vshrl.u32 %v1326, 7
    %v1328 = vsub.s32 0, %v1327
    %v1329 = vrot.slane %v973, %v1328
    %v1330 = vlaneseq
    %v1331 = vshrl.u32 %v1330, 7
    %v1332 = vsub.s32 0, %v1331
    %v1333 = vrot.slane %v974, %v1332
    %v1334 = vlaneseq
    %v1335 = vshrl.u32 %v1334, 7
    %v1336 = vsub.s32 0, %v1335
    %v1337 = vrot.slane %v975, %v1336
    %v1338 = vlaneseq
    %v1339 = vshrl.u32 %v1338, 7
    %v1340 = vsub.s32 0, %v1339
    %v1341 = vrot.slane %v976, %v1340
    %v1342 = vlaneseq
    %v1343 = vshrl.u32 %v1342, 7
    %v1344 = vsub.s32 0, %v1343
    %v1345 = vrot.slane %v977, %v1344
    %v1346 = vlaneseq
    %v1347 = vshrl.u32 %v1346, 7
    %v1348 = vsub.s32 0, %v1347
    %v1349 = vrot.slane %v978, %v1348
    %v1350 = vlaneseq
    %v1351 = vshrl.u32 %v1350, 7
    %v1352 = vsub.s32 0, %v1351
    %v1353 = vrot.slane %v979, %v1352
    %v1354 = vlaneseq
    %v1355 = vshrl.u32 %v1354, 7
    %v1356 = vsub.s32 0, %v1355
    %v1357 = vrot.slane %v980, %v1356
    %v1358 = vlaneseq
    %v1359 = vshrl.u32 %v1358, 7
    %v1360 = vsub.s32 0, %v1359
    %v1361 = vrot.slane %v981, %v1360
    %v1362 = vlaneseq
    %v1363 = vshrl.u32 %v1362, 7
    %v1364 = vsub.s32 0, %v1363
    %v1365 = vrot.slane %v982, %v1364
    %v1366 = vlaneseq
    %v1367 = vshrl.u32 %v1366, 7
    %v1368 = vsub.s32 0, %v1367
    %v1369 = vrot.slane %v983, %v1368
    %v1370 = vlaneseq
    %v1371 = vshrl.u32 %v1370, 7
    %v1372 = vsub.s32 0, %v1371
    %v1373 = vrot.slane %v984, %v1372
    %v1374 = vlaneseq
    %v1375 = vshrl.u32 %v1374, 7
    %v1376 = vsub.s32 0, %v1375
    %v1377 = vrot.slane %v985, %v1376
    %v1378 = vmul.f32 %v1208, %v1317
    %v1379 = vmul.f32 %v1215, %v1321
    %v1380 = vmul.f32 %v1222, %v1325
    %v1381 = vmul.f32 %v1229, %v1329
    %v1382 = vmul.f32 %v1236, %v1333
    %v1383 = vmul.f32 %v1243, %v1337
    %v1384 = vmul.f32 %v1250, %v1341
    %v1385 = vmul.f32 %v1257, %v1345
    %v1386 = vmul.f32 %v1264, %v1349
    %v1387 = vmul.f32 %v1271, %v1353
    %v1388 = vmul.f32 %v1278, %v1357
    %v1389 = vmul.f32 %v1285, %v1361
    %v1390 = vmul.f32 %v1292, %v1365
    %v1391 = vmul.f32 %v1299, %v1369
    %v1392 = vmul.f32 %v1306, %v1373
    %v1393 = vmul.f32 %v1313, %v1377
    %v1394 = vsel %vm802, %v1378, 0.0
    %v1395 = vsel %vm802, %v1379, 0.0
    %v1396 = vadd.f32 %v1394, %v1395
    %v1397 = vsel %vm802, %v1380, 0.0
    %v1398 = vadd.f32 %v1396, %v1397
    %v1399 = vsel %vm802, %v1381, 0.0
    %v1400 = vadd.f32 %v1398, %v1399
    %v1401 = vsel %vm802, %v1382, 0.0
    %v1402 = vsel %vm802, %v1383, 0.0
    %v1403 = vadd.f32 %v1401, %v1402
    %v1404 = vsel %vm802, %v1384, 0.0
    %v1405 = vadd.f32 %v1403, %v1404
    %v1406 = vsel %vm802, %v1385, 0.0
    %v1407 = vadd.f32 %v1405, %v1406
    %v1408 = vsel %vm802, %v1386, 0.0
    %v1409 = vsel %vm802, %v1387, 0.0
    %v1410 = vadd.f32 %v1408, %v1409
    %v1411 = vsel %vm802, %v1388, 0.0
    %v1412 = vadd.f32 %v1410, %v1411
    %v1413 = vsel %vm802, %v1389, 0.0
    %v1414 = vadd.f32 %v1412, %v1413
    %v1415 = vsel %vm802, %v1390, 0.0
    %v1416 = vsel %vm802, %v1391, 0.0
    %v1417 = vadd.f32 %v1415, %v1416
    %v1418 = vsel %vm802, %v1392, 0.0
    %v1419 = vadd.f32 %v1417, %v1418
    %v1420 = vsel %vm802, %v1393, 0.0
    %v1421 = vadd.f32 %v1419, %v1420
    %v1422 = vmul.f32 %v1400, %v58
    %v1423 = vmul.f32 %v1407, %v58
    %v1424 = vmul.f32 %v1414, %v58
    %v1425 = vmul.f32 %v1421, %v58
    %v1426 = vsel %vm802, %v1422, 0.0
    %1427 = vadd.xlane.f32.xlu0 %v1426
    %v1428 = vpop.xlane.xlu0 %1427
    %v1429 = vsel %vm802, %v1423, 0.0
    %1430 = vadd.xlane.f32.xlu0 %v1429
    %v1431 = vpop.xlane.xlu0 %1430
    %v1432 = vsel %vm802, %v1424, 0.0
    %1433 = vadd.xlane.f32.xlu0 %v1432
    %v1434 = vpop.xlane.xlu0 %1433
    %v1435 = vsel %vm802, %v1425, 0.0
    %1436 = vadd.xlane.f32.xlu0 %v1435
    %v1437 = vpop.xlane.xlu0 %1436
    %v1442 = vlaneseq
    %v1443 = vand.u32 %v1442, 127
    %v1444 = vlaneseq
    %v1445 = vshrl.u32 %v1444, 7
    %v1446 = vsub.s32 %v1443, %v1445
    %v1447 = vrot.slane %v1428, %v1446
    %v1448 = vlaneseq
    %v1449 = vshrl.u32 %v1448, 7
    %v1450 = vsub.s32 %v1443, %v1449
    %v1451 = vrot.slane %v1431, %v1450
    %v1452 = vlaneseq
    %v1453 = vshrl.u32 %v1452, 7
    %v1454 = vsub.s32 %v1443, %v1453
    %v1455 = vrot.slane %v1434, %v1454
    %v1456 = vlaneseq
    %v1457 = vshrl.u32 %v1456, 7
    %v1458 = vsub.s32 %v1443, %v1457
    %v1459 = vrot.slane %v1437, %v1458
    %v1460 = vsel %vm1003, %v1451, %v1447
    %v1461 = vsel %vm1006, %v1455, %v1460
    %v1462 = vsel %vm1009, %v1459, %v1461
    %v1464 = vsel %vm1125, %v1462, -inf
    %1465 = vmax.xlane.f32.xlu0 %v1464
    %v1466 = vpop.xlane.xlu0 %1465
    %v1468 = vlaneseq
    %v1469 = vshrl.u32 %v1468, 7
    %v1470 = vsub.s32 0, %v1469
    %v1471 = vrot.slane %v1466, %v1470
    %v1472 = vlaneseq
    %v1473 = vshrl.u32 %v1472, 7
    %v1474 = vsub.s32 1, %v1473
    %v1475 = vrot.slane %v1466, %v1474
    %v1476 = vlaneseq
    %v1477 = vshrl.u32 %v1476, 7
    %v1478 = vsub.s32 2, %v1477
    %v1479 = vrot.slane %v1466, %v1478
    %v1480 = vlaneseq
    %v1481 = vshrl.u32 %v1480, 7
    %v1482 = vsub.s32 3, %v1481
    %v1483 = vrot.slane %v1466, %v1482
    %v1488 = vsub.f32 %v1428, %v1471
    %v1489 = vsub.f32 %v1431, %v1475
    %v1490 = vsub.f32 %v1434, %v1479
    %v1491 = vsub.f32 %v1437, %v1483
    %v1492 = vmul.f32 %v1488, 1.442695
    %v1493 = vpow.pop %v1492
    %v1494 = vmul.f32 %v1489, 1.442695
    %v1495 = vpow.pop %v1494
    %v1496 = vmul.f32 %v1490, 1.442695
    %v1497 = vpow.pop %v1496
    %v1498 = vmul.f32 %v1491, 1.442695
    %v1499 = vpow.pop %v1498
    %1504 = vset.pattern.permute.xlu0 0
    %1505 = vperm.xlu0 %1504, %v1493
    %v1506 = vpop.permute.xlu0 %1505
    %1507 = vset.pattern.permute.xlu0 0
    %1508 = vperm.xlu0 %1507, %v1495
    %v1509 = vpop.permute.xlu0 %1508
    %1510 = vset.pattern.permute.xlu0 0
    %1511 = vperm.xlu0 %1510, %v1497
    %v1512 = vpop.permute.xlu0 %1511
    %1513 = vset.pattern.permute.xlu0 0
    %1514 = vperm.xlu0 %1513, %v1499
    %v1515 = vpop.permute.xlu0 %1514
    %v1516 = vlaneseq
    %v1517 = vshrl.u32 %v1516, 7
    %v1518 = vsub.s32 %v1443, %v1517
    %v1519 = vrot.slane %v1506, %v1518
    %v1520 = vlaneseq
    %v1521 = vshrl.u32 %v1520, 7
    %v1522 = vsub.s32 %v1443, %v1521
    %v1523 = vrot.slane %v1509, %v1522
    %v1524 = vlaneseq
    %v1525 = vshrl.u32 %v1524, 7
    %v1526 = vsub.s32 %v1443, %v1525
    %v1527 = vrot.slane %v1512, %v1526
    %v1528 = vlaneseq
    %v1529 = vshrl.u32 %v1528, 7
    %v1530 = vsub.s32 %v1443, %v1529
    %v1531 = vrot.slane %v1515, %v1530
    %v1532 = vsel %vm1003, %v1523, %v1519
    %v1533 = vsel %vm1006, %v1527, %v1532
    %v1534 = vsel %vm1009, %v1531, %v1533
    %v1536 = vsel %vm1125, %v1534, 0.0
    %1537 = vadd.xlane.f32.xlu0 %v1536
    %v1538 = vpop.xlane.xlu0 %1537
    %v1539 = vlog2.pop %v1538
    %v1540 = vmul.f32 %v1539, 0.6931472
    %v1541 = vadd.f32 %v1466, %v1540
    %v1543 = vlaneseq
    %v1544 = vshrl.u32 %v1543, 7
    %v1545 = vsub.s32 0, %v1544
    %v1546 = vrot.slane %v1541, %v1545
    %v1547 = vlaneseq
    %v1548 = vshrl.u32 %v1547, 7
    %v1549 = vsub.s32 1, %v1548
    %v1550 = vrot.slane %v1541, %v1549
    %v1551 = vlaneseq
    %v1552 = vshrl.u32 %v1551, 7
    %v1553 = vsub.s32 2, %v1552
    %v1554 = vrot.slane %v1541, %v1553
    %v1555 = vlaneseq
    %v1556 = vshrl.u32 %v1555, 7
    %v1557 = vsub.s32 3, %v1556
    %v1558 = vrot.slane %v1541, %v1557
    %v1563 = vsub.f32 %v1428, %v1546
    %v1564 = vsub.f32 %v1431, %v1550
    %v1565 = vsub.f32 %v1434, %v1554
    %v1566 = vsub.f32 %v1437, %v1558
    %1571 = vset.pattern.permute.xlu0 0
    %1572 = vperm.xlu0 %1571, %v1563
    %v1573 = vpop.permute.xlu0 %1572
    %1574 = vset.pattern.permute.xlu0 0
    %1575 = vperm.xlu0 %1574, %v1564
    %v1576 = vpop.permute.xlu0 %1575
    %1577 = vset.pattern.permute.xlu0 0
    %1578 = vperm.xlu0 %1577, %v1565
    %v1579 = vpop.permute.xlu0 %1578
    %1580 = vset.pattern.permute.xlu0 0
    %1581 = vperm.xlu0 %1580, %v1566
    %v1582 = vpop.permute.xlu0 %1581
    %v1583 = vlaneseq
    %v1584 = vshrl.u32 %v1583, 7
    %v1585 = vsub.s32 %v1443, %v1584
    %v1586 = vrot.slane %v1573, %v1585
    %v1587 = vlaneseq
    %v1588 = vshrl.u32 %v1587, 7
    %v1589 = vsub.s32 %v1443, %v1588
    %v1590 = vrot.slane %v1576, %v1589
    %v1591 = vlaneseq
    %v1592 = vshrl.u32 %v1591, 7
    %v1593 = vsub.s32 %v1443, %v1592
    %v1594 = vrot.slane %v1579, %v1593
    %v1595 = vlaneseq
    %v1596 = vshrl.u32 %v1595, 7
    %v1597 = vsub.s32 %v1443, %v1596
    %v1598 = vrot.slane %v1582, %v1597
    %v1599 = vsel %vm1003, %v1590, %v1586
    %v1600 = vsel %vm1006, %v1594, %v1599
    %v1601 = vsel %vm1009, %v1598, %v1600
    %1603 = vst.msk [vmem:[#allocation8] sm:$0xf] %vm1125, %v1601
    // Predicated region
    $region30: #{tpu_custom_call.1} parent=1 // pred_check
      _
    $region31: #{tpu_custom_call.1} parent=1 // pred_check_branch
      %1605 = sbr.rel (0) target = $region33
    $region32: #{tpu_custom_call.1} parent=1 // pred_region
      %s1607 = ssub.s32 64, 64
      %1608 = vsyncadd [#allocation4], %s1607
      %s1610 = sshll.u32 [#allocation8], 4
      %s1611 = int_to_ptr.vmem [resolvable:$true] %s1610
      %1613 = dma.vmem_to_hbm [thread:$0]  %s1611, 64, %s4, [#allocation4]
    $region33: #{tpu_custom_call.1} parent=1 // pred_fallthru
      _
    // Predicated region
    $region34: #{tpu_custom_call.1} parent=1 // pred_check
      _
    $region35: #{tpu_custom_call.1} parent=1 // pred_check_branch
      %1615 = sbr.rel (0) target = $region37
    $region36: #{tpu_custom_call.1} parent=1 // pred_region
      %1616 = dma.done [#allocation4], 64
    $region37: #{tpu_custom_call.1} parent=1 // pred_fallthru
      _
    %1617 = vsyncpa [#allocation3], 1
    %1618 = vsyncpa [#allocation6], 1
    %1619 = vsyncpa [#allocation4], 1

</llo_original>
